<compile_context>
chip_gen: v6e
topology: v6e:2x2x1
jax: 0.10.0
libtpu: 0.0.40
codegen_flags: <defaults>
</compile_context>

<pallas_src>
import functools

import jax
import jax.numpy as jnp
import numpy as np
from jax import lax
from jax.experimental import pallas as pl
from jax.experimental.pallas import tpu as pltpu


# Scoped VMEM budget.  Re-derive per generation: keep <= ~56 MiB on v7x
# (64 MiB physical VMEM); up to ~100 MiB is fine on v5e/v6e (128 MiB).
_VMEM_LIMIT_BYTES = 48 * 1024 * 1024

_MASK_VALUE = -1e30  # finite "minus infinity" for causal masking


def rope_tables(n, att_width):
    """Base RoPE tables, shape (n, att_width // 2); same theta as MHA.make_sin_cos."""
    half = att_width // 2
    freqs = -jnp.linspace(0.0, 1.0, half)
    theta = (jnp.arange(n, dtype=jnp.float32)[:, None]
             * jnp.power(jnp.float32(10000.0), freqs))
    return jnp.sin(theta), jnp.cos(theta)


def _rotate_half(t, att_width):
    half = att_width // 2
    if att_width % 128 == 0:
        # Lane-aligned head width: XLU rotate, off the VALU critical path.
        return pltpu.roll(t, shift=half, axis=-1)
    # Small / unaligned head widths: static half-swap (still no select).
    return jnp.concatenate([t[:, half:], t[:, :half]], axis=-1)


# ---------------------------------------------------------------------------
# Kernel 1: q/k/v projection + RoPE.  One (batch, head, seq-block) per step.
# ---------------------------------------------------------------------------
def proj_kernel(x_ref, wq_ref, wk_ref, wv_ref, sin_ref, cos_ref,
                q_ref, k_ref, v_ref):
    att_width = sin_ref.shape[-1]
    x = x_ref[0]                         # (ts, W)   compute dtype
    sin = sin_ref[...]                   # (ts, A)   f32, sign pre-baked
    cos = cos_ref[...]                   # (ts, A)   f32

    q = jnp.dot(x, wq_ref[0], preferred_element_type=jnp.float32)   # (ts, A)
    k = jnp.dot(x, wk_ref[0], preferred_element_type=jnp.float32)
    v = jnp.dot(x, wv_ref[0], preferred_element_type=jnp.float32)

    def rope(t):                         # rotate-half layout RoPE
        return t * cos + _rotate_half(t, att_width) * sin

    q_ref[0, 0] = rope(q).astype(q_ref.dtype)
    k_ref[0, 0] = rope(k).astype(k_ref.dtype)
    v_ref[0, 0] = v.astype(v_ref.dtype)


# ---------------------------------------------------------------------------
# Kernel 2: flash attention + fused output projection.
# Grid: (batch, q-block, head, kv-block); head & kv axes are accumulation axes.
# ---------------------------------------------------------------------------
def flash_kernel(q_ref, k_ref, v_ref, wo_ref, o_ref,
                 m_s, l_s, acc_s, out_s, *, approx_reciprocal):
    q_i = pl.program_id(1)
    h_i = pl.program_id(2)
    kv_i = pl.program_id(3)
    n_h = pl.num_programs(2)
    n_kv = pl.num_programs(3)
    blk = q_ref.shape[2]

    @pl.when(kv_i == 0)
    def _init_head():
        m_s[...] = jnp.full(m_s.shape, _MASK_VALUE, m_s.dtype)
        l_s[...] = jnp.zeros(l_s.shape, l_s.dtype)
        acc_s[...] = jnp.zeros(acc_s.shape, acc_s.dtype)

    @pl.when(jnp.logical_and(kv_i == 0, h_i == 0))
    def _init_out():
        out_s[...] = jnp.zeros(out_s.shape, out_s.dtype)

    # Causal: kv blocks strictly above the diagonal contribute nothing —
    # skip their compute entirely (their DMAs are also de-duplicated by the
    # clamped kv index_map in the wrapper).
    @pl.when(kv_i <= q_i)
    def _accumulate():
        q = q_ref[0, 0]                  # (blk, A)  compute dtype
        k = k_ref[0, 0]
        v = v_ref[0, 0]
        s = lax.dot_general(q, k, (((1,), (1,)), ((), ())),
                            preferred_element_type=jnp.float32)     # (blk, blk)
        # Triangular mask is only live on the diagonal block.
        row = lax.broadcasted_iota(jnp.int32, (blk, blk), 0)
        col = lax.broadcasted_iota(jnp.int32, (blk, blk), 1)
        s = jnp.where(jnp.logical_or(kv_i < q_i, row >= col), s, _MASK_VALUE)

        m_prev = m_s[...]                                            # f32 stats
        m_new = jnp.maximum(m_prev, jnp.max(s, axis=-1, keepdims=True))
        alpha = jnp.exp(m_prev - m_new)
        p = jnp.exp(s - m_new)
        l_s[...] = alpha * l_s[...] + jnp.sum(p, axis=-1, keepdims=True)
        acc_s[...] = alpha * acc_s[...] + jnp.dot(
            p.astype(v.dtype), v, preferred_element_type=jnp.float32)
        m_s[...] = m_new

    # Finalize this head: deferred normalization + fold in the per-head slice
    # of the output projection (no concat of head outputs).
    @pl.when(kv_i == n_kv - 1)
    def _finalize_head():
        inv_l = pl.reciprocal(l_s[...], approx=approx_reciprocal)
        o_h = acc_s[...] * inv_l                                     # (blk, A) f32
        out_s[...] += jnp.dot(o_h.astype(wo_ref.dtype), wo_ref[0],
                              preferred_element_type=jnp.float32)

    # Single lane-dense (blk, W) store per (batch, q-block).
    @pl.when(jnp.logical_and(kv_i == n_kv - 1, h_i == n_h - 1))
    def _store():
        o_ref[0] = out_s[...].astype(o_ref.dtype)


# ---------------------------------------------------------------------------
# Wrapper
# ---------------------------------------------------------------------------
def mha_forward(x, wq, wk, wv, wo, *, num_heads, att_width,
                block_size=256, compute_dtype=jnp.bfloat16,
                approx_reciprocal=True):
    """Causal self-attention forward of `MHA`.

    x : (B, N, W); wq/wk/wv : (H*A, W); wo : (W, H*A)  (PyTorch layouts).
    """
    B, N, W = x.shape
    H, A = num_heads, att_width
    assert wq.shape == (H * A, W) and wk.shape == (H * A, W)
    assert wv.shape == (H * A, W) and wo.shape == (W, H * A)
    assert A % 2 == 0

    blk = min(block_size, N)
    assert N % blk == 0, "sequence length must be divisible by the block size"
    n_blk = N // blk
    cd = compute_dtype

    # --- host-side weight prep ---------------------------------------------
    # Per-head rotate-half permutation of wq/wk columns (even features first,
    # odd second).  Applying the same permutation to q and k leaves q.k^T
    # unchanged; v and wo stay in the original order.
    a_idx = np.arange(A)
    half_perm = np.concatenate([a_idx[0::2], a_idx[1::2]])
    perm = (np.arange(H)[:, None] * A + half_perm[None, :]).reshape(-1)
    scale = float(1.0 / np.sqrt(A))      # folded into wq (RoPE is linear)

    wq_h = (wq[perm] * scale).reshape(H, A, W).transpose(0, 2, 1).astype(cd)  # (H,W,A)
    wk_h = wk[perm].reshape(H, A, W).transpose(0, 2, 1).astype(cd)            # (H,W,A)
    wv_h = wv.reshape(H, A, W).transpose(0, 2, 1).astype(cd)                  # (H,W,A)
    wo_h = wo.T.reshape(H, A, W).astype(cd)                                   # (H,A,W)

    # RoPE tables in rotate-half layout, sign baked into sin; passed once as
    # (N, A) — NOT tiled to (N, H*A) — and shared by all heads.
    sin_b, cos_b = rope_tables(N, A)
    cos_t = jnp.concatenate([cos_b, cos_b], axis=-1).astype(jnp.float32)
    sin_t = jnp.concatenate([-sin_b, sin_b], axis=-1).astype(jnp.float32)

    x_cd = x.astype(cd)

    # --- kernel 1: projections + RoPE -> (B, H, N, A) ------------------------
    qkv_shape = jax.ShapeDtypeStruct((B, H, N, A), cd)
    q_r, k_r, v_r = pl.pallas_call(
        proj_kernel,
        out_shape=(qkv_shape, qkv_shape, qkv_shape),
        grid_spec=pltpu.PrefetchScalarGridSpec(
            num_scalar_prefetch=0,
            grid=(B, H, n_blk),
            in_specs=[
                pl.BlockSpec((1, blk, W), lambda b, h, s: (b, s, 0)),   # x
                pl.BlockSpec((1, W, A), lambda b, h, s: (h, 0, 0)),     # wq (scaled, perm)
                pl.BlockSpec((1, W, A), lambda b, h, s: (h, 0, 0)),     # wk (perm)
                pl.BlockSpec((1, W, A), lambda b, h, s: (h, 0, 0)),     # wv
                pl.BlockSpec((blk, A), lambda b, h, s: (s, 0)),         # sin (pre-signed)
                pl.BlockSpec((blk, A), lambda b, h, s: (s, 0)),         # cos
            ],
            out_specs=(
                pl.BlockSpec((1, 1, blk, A), lambda b, h, s: (b, h, s, 0)),
                pl.BlockSpec((1, 1, blk, A), lambda b, h, s: (b, h, s, 0)),
                pl.BlockSpec((1, 1, blk, A), lambda b, h, s: (b, h, s, 0)),
            ),
        ),
        compiler_params=pltpu.CompilerParams(
            dimension_semantics=("parallel", "parallel", "parallel"),
            vmem_limit_bytes=_VMEM_LIMIT_BYTES),
    )(x_cd, wq_h, wk_h, wv_h, sin_t, cos_t)

    # --- kernel 2: flash attention + fused output projection -----------------
    kernel = functools.partial(flash_kernel, approx_reciprocal=approx_reciprocal)
    out = pl.pallas_call(
        kernel,
        out_shape=jax.ShapeDtypeStruct((B, N, W), x.dtype),
        grid_spec=pltpu.PrefetchScalarGridSpec(
            num_scalar_prefetch=0,
            grid=(B, n_blk, H, n_blk),          # (batch, q-blk, head, kv-blk)
            in_specs=[
                pl.BlockSpec((1, 1, blk, A),
                             lambda b, q, h, kv: (b, h, q, 0)),                    # q
                pl.BlockSpec((1, 1, blk, A),
                             lambda b, q, h, kv: (b, h, jnp.minimum(kv, q), 0)),   # k
                pl.BlockSpec((1, 1, blk, A),
                             lambda b, q, h, kv: (b, h, jnp.minimum(kv, q), 0)),   # v
                pl.BlockSpec((1, A, W), lambda b, q, h, kv: (h, 0, 0)),            # wo
            ],
            out_specs=pl.BlockSpec((1, blk, W), lambda b, q, h, kv: (b, q, 0)),
            scratch_shapes=[
                pltpu.VMEM((blk, 1), jnp.float32),   # running max
                pltpu.VMEM((blk, 1), jnp.float32),   # running sum
                pltpu.VMEM((blk, A), jnp.float32),   # per-head accumulator
                pltpu.VMEM((blk, W), jnp.float32),   # cross-head output accumulator
            ],
        ),
        compiler_params=pltpu.CompilerParams(
            dimension_semantics=("parallel", "parallel", "arbitrary", "arbitrary"),
            vmem_limit_bytes=_VMEM_LIMIT_BYTES),
    )(q_r, k_r, v_r, wo_h)
    return out


# ---------------------------------------------------------------------------
# Pure-JAX reference (literal translation of the PyTorch forward)
# ---------------------------------------------------------------------------
def mha_reference(x, wq, wk, wv, wo, *, num_heads, att_width):
    B, N, W = x.shape
    sin_b, cos_b = rope_tables(N, att_width)
    sin = jnp.repeat(sin_b, 2, axis=-1)          # interleaved, as in the module
    cos = jnp.repeat(cos_b, 2, axis=-1)

    def proj(t, w):                              # nn.Linear (no bias): y = t @ w.T
        return jnp.einsum('bnw,ow->bno', t, w)

    def to_heads(t):
        return t.reshape(B, N, num_heads, att_width).transpose(0, 2, 1, 3)

    q, k, v = (to_heads(proj(x, w)) for w in (wq, wk, wv))   # (B, H, N, A)

    def apply_rope(t):
        t_ = t.reshape(t.shape[:-1] + (att_width // 2, 2))
        rot = jnp.stack([-t_[..., 1], t_[..., 0]], axis=-1).reshape(t.shape)
        return t * cos + rot * sin

    q, k = apply_rope(q), apply_rope(k)
    s = jnp.einsum('bhqa,bhka->bhqk', q, k) / np.sqrt(att_width)
    mask = jnp.tril(jnp.ones((N, N), dtype=bool))
    s = jnp.where(mask, s, -jnp.inf)
    p = jax.nn.softmax(s, axis=-1)
    o = jnp.einsum('bhqk,bhka->bhqa', p, v)
    o = o.transpose(0, 2, 1, 3).reshape(B, N, num_heads * att_width)
    return jnp.einsum('bno,wo->bnw', o, wo)


# ---------------------------------------------------------------------------
if __name__ == "__main__":
    def run_case(B, N, W, H, A, block, compute_dtype, tol, approx_recip):
        key = jax.random.PRNGKey(0)
        kx, kq, kk, kv_, ko = jax.random.split(key, 5)
        x = jax.random.normal(kx, (B, N, W), dtype=jnp.float32)
        wq = jax.random.normal(kq, (H * A, W), dtype=jnp.float32) * 0.05
        wk = jax.random.normal(kk, (H * A, W), dtype=jnp.float32) * 0.05
        wv = jax.random.normal(kv_, (H * A, W), dtype=jnp.float32) * 0.05
        wo = jax.random.normal(ko, (W, H * A), dtype=jnp.float32) * 0.05

        out = mha_forward(x, wq, wk, wv, wo, num_heads=H, att_width=A,
                          block_size=block, compute_dtype=compute_dtype,
                          approx_reciprocal=approx_recip)
        out = jax.block_until_ready(out)
        ref = mha_reference(x, wq, wk, wv, wo, num_heads=H, att_width=A)
        np.testing.assert_allclose(np.asarray(out), np.asarray(ref),
                                   rtol=tol, atol=tol)

    # Small shapes (single attention block), exact f32 path.
    run_case(B=2, N=8, W=32, H=4, A=8, block=256,
             compute_dtype=jnp.float32, tol=5e-4, approx_recip=False)
    # Tiled flash path: multiple q/kv blocks, multiple heads, causal skipping, f32.
    run_case(B=2, N=256, W=256, H=4, A=64, block=128,
             compute_dtype=jnp.float32, tol=5e-4, approx_recip=False)
    # bf16 MXU inputs with f32 softmax/accumulators (v6e/v7x recommendation).
    run_case(B=2, N=256, W=256, H=4, A=64, block=128,
             compute_dtype=jnp.bfloat16, tol=5e-2, approx_recip=True)

    print("KERNEL_OK")
</pallas_src>

<mosaic_0001>
module attributes {stable_mosaic.version = 11 : i64} {
  func.func @proj_kernel(%arg0: i32, %arg1: i32, %arg2: i32, %arg3: memref<1x8x32xf32, #tpu.memory_space<vmem>>, %arg4: memref<1x32x8xf32, #tpu.memory_space<vmem>>, %arg5: memref<1x32x8xf32, #tpu.memory_space<vmem>>, %arg6: memref<1x32x8xf32, #tpu.memory_space<vmem>>, %arg7: memref<8x8xf32, #tpu.memory_space<vmem>>, %arg8: memref<8x8xf32, #tpu.memory_space<vmem>>, %arg9: memref<1x1x8x8xf32, #tpu.memory_space<vmem>>, %arg10: memref<1x1x8x8xf32, #tpu.memory_space<vmem>>, %arg11: memref<1x1x8x8xf32, #tpu.memory_space<vmem>>) attributes {dimension_semantics = [#tpu.dimension_semantics<parallel>, #tpu.dimension_semantics<parallel>, #tpu.dimension_semantics<parallel>], iteration_bounds = array<i64: 2, 4, 1>, scalar_prefetch = 0 : i64, scratch_operands = 0 : i64, tpu.core_type = #tpu.core_type<tc>, window_params = [{transform_indices = @transform_0, window_bounds = array<i64: 1, 8, 32>}, {transform_indices = @transform_1, window_bounds = array<i64: 1, 32, 8>}, {transform_indices = @transform_2, window_bounds = array<i64: 1, 32, 8>}, {transform_indices = @transform_3, window_bounds = array<i64: 1, 32, 8>}, {transform_indices = @transform_4, window_bounds = array<i64: 8, 8>}, {transform_indices = @transform_5, window_bounds = array<i64: 8, 8>}, {transform_indices = @transform_6, window_bounds = array<i64: 1, 1, 8, 8>}, {transform_indices = @transform_7, window_bounds = array<i64: 1, 1, 8, 8>}, {transform_indices = @transform_8, window_bounds = array<i64: 1, 1, 8, 8>}]} {
    %c0 = arith.constant 0 : index
    %c0_0 = arith.constant 0 : index
    %c0_1 = arith.constant 0 : index
    %0 = vector.load %arg3[%c0, %c0_0, %c0_1] : memref<1x8x32xf32, #tpu.memory_space<vmem>>, vector<1x8x32xf32>
    %1 = vector.shape_cast %0 : vector<1x8x32xf32> to vector<8x32xf32>
    %c0_2 = arith.constant 0 : index
    %c0_3 = arith.constant 0 : index
    %2 = vector.load %arg7[%c0_2, %c0_3] : memref<8x8xf32, #tpu.memory_space<vmem>>, vector<8x8xf32>
    %c0_4 = arith.constant 0 : index
    %c0_5 = arith.constant 0 : index
    %3 = vector.load %arg8[%c0_4, %c0_5] : memref<8x8xf32, #tpu.memory_space<vmem>>, vector<8x8xf32>
    %c0_6 = arith.constant 0 : index
    %c0_7 = arith.constant 0 : index
    %c0_8 = arith.constant 0 : index
    %4 = vector.load %arg4[%c0_6, %c0_7, %c0_8] : memref<1x32x8xf32, #tpu.memory_space<vmem>>, vector<1x32x8xf32>
    %5 = vector.shape_cast %4 : vector<1x32x8xf32> to vector<32x8xf32>
    %cst = arith.constant dense<0.000000e+00> : vector<8x8xf32>
    %6 = tpu.matmul %1, %5, %cst {dimension_numbers = #tpu.dot_dimension_numbers<[1], [0], [0], [1], [0, 0, 1, 1], [], []>} : vector<8x32xf32>, vector<32x8xf32>, vector<8x8xf32> -> vector<8x8xf32>
    %c0_9 = arith.constant 0 : index
    %c0_10 = arith.constant 0 : index
    %c0_11 = arith.constant 0 : index
    %7 = vector.load %arg5[%c0_9, %c0_10, %c0_11] : memref<1x32x8xf32, #tpu.memory_space<vmem>>, vector<1x32x8xf32>
    %8 = vector.shape_cast %7 : vector<1x32x8xf32> to vector<32x8xf32>
    %cst_12 = arith.constant dense<0.000000e+00> : vector<8x8xf32>
    %9 = tpu.matmul %1, %8, %cst_12 {dimension_numbers = #tpu.dot_dimension_numbers<[1], [0], [0], [1], [0, 0, 1, 1], [], []>} : vector<8x32xf32>, vector<32x8xf32>, vector<8x8xf32> -> vector<8x8xf32>
    %c0_13 = arith.constant 0 : index
    %c0_14 = arith.constant 0 : index
    %c0_15 = arith.constant 0 : index
    %10 = vector.load %arg6[%c0_13, %c0_14, %c0_15] : memref<1x32x8xf32, #tpu.memory_space<vmem>>, vector<1x32x8xf32>
    %11 = vector.shape_cast %10 : vector<1x32x8xf32> to vector<32x8xf32>
    %cst_16 = arith.constant dense<0.000000e+00> : vector<8x8xf32>
    %12 = tpu.matmul %1, %11, %cst_16 {dimension_numbers = #tpu.dot_dimension_numbers<[1], [0], [0], [1], [0, 0, 1, 1], [], []>} : vector<8x32xf32>, vector<32x8xf32>, vector<8x8xf32> -> vector<8x8xf32>
    %13 = arith.mulf %6, %3 : vector<8x8xf32>
    %14 = vector.extract_strided_slice %6 {offsets = [0, 4], sizes = [8, 4], strides = [1, 1]} : vector<8x8xf32> to vector<8x4xf32>
    %15 = vector.extract_strided_slice %6 {offsets = [0, 0], sizes = [8, 4], strides = [1, 1]} : vector<8x8xf32> to vector<8x4xf32>
    %16 = tpu.concatenate %14, %15 in 1 : vector<8x4xf32>, vector<8x4xf32> -> vector<8x8xf32>
    %17 = arith.mulf %16, %2 : vector<8x8xf32>
    %18 = arith.addf %13, %17 : vector<8x8xf32>
    %c0_17 = arith.constant 0 : index
    %c0_18 = arith.constant 0 : index
    %c0_19 = arith.constant 0 : index
    %c0_20 = arith.constant 0 : index
    %19 = vector.load %arg9[%c0_17, %c0_18, %c0_19, %c0_20] : memref<1x1x8x8xf32, #tpu.memory_space<vmem>>, vector<1x1x8x8xf32>
    %20 = vector.shape_cast %19 : vector<1x1x8x8xf32> to vector<8x8xf32>
    %21 = vector.shape_cast %18 : vector<8x8xf32> to vector<1x1x8x8xf32>
    tpu.vector_store %arg9[%c0_17, %c0_18, %c0_19, %c0_20], %21 {strides = array<i32>} : memref<1x1x8x8xf32, #tpu.memory_space<vmem>>, vector<1x1x8x8xf32>,
    %22 = arith.mulf %9, %3 : vector<8x8xf32>
    %23 = vector.extract_strided_slice %9 {offsets = [0, 4], sizes = [8, 4], strides = [1, 1]} : vector<8x8xf32> to vector<8x4xf32>
    %24 = vector.extract_strided_slice %9 {offsets = [0, 0], sizes = [8, 4], strides = [1, 1]} : vector<8x8xf32> to vector<8x4xf32>
    %25 = tpu.concatenate %23, %24 in 1 : vector<8x4xf32>, vector<8x4xf32> -> vector<8x8xf32>
    %26 = arith.mulf %25, %2 : vector<8x8xf32>
    %27 = arith.addf %22, %26 : vector<8x8xf32>
    %c0_21 = arith.constant 0 : index
    %c0_22 = arith.constant 0 : index
    %c0_23 = arith.constant 0 : index
    %c0_24 = arith.constant 0 : index
    %28 = vector.load %arg10[%c0_21, %c0_22, %c0_23, %c0_24] : memref<1x1x8x8xf32, #tpu.memory_space<vmem>>, vector<1x1x8x8xf32>
    %29 = vector.shape_cast %28 : vector<1x1x8x8xf32> to vector<8x8xf32>
    %30 = vector.shape_cast %27 : vector<8x8xf32> to vector<1x1x8x8xf32>
    tpu.vector_store %arg10[%c0_21, %c0_22, %c0_23, %c0_24], %30 {strides = array<i32>} : memref<1x1x8x8xf32, #tpu.memory_space<vmem>>, vector<1x1x8x8xf32>,
    %c0_25 = arith.constant 0 : index
    %c0_26 = arith.constant 0 : index
    %c0_27 = arith.constant 0 : index
    %c0_28 = arith.constant 0 : index
    %31 = vector.load %arg11[%c0_25, %c0_26, %c0_27, %c0_28] : memref<1x1x8x8xf32, #tpu.memory_space<vmem>>, vector<1x1x8x8xf32>
    %32 = vector.shape_cast %31 : vector<1x1x8x8xf32> to vector<8x8xf32>
    %33 = vector.shape_cast %12 : vector<8x8xf32> to vector<1x1x8x8xf32>
    tpu.vector_store %arg11[%c0_25, %c0_26, %c0_27, %c0_28], %33 {strides = array<i32>} : memref<1x1x8x8xf32, #tpu.memory_space<vmem>>, vector<1x1x8x8xf32>,
    return
  }
  func.func @transform_0(%arg0: i32, %arg1: i32, %arg2: i32) -> (i32, i32, i32) {
    %c0_i32 = arith.constant 0 : i32
    %c0_i32_0 = arith.constant 0 : i32
    return %arg0, %arg2, %c0_i32 : i32, i32, i32
  }
  func.func @transform_1(%arg0: i32, %arg1: i32, %arg2: i32) -> (i32, i32, i32) {
    %c0_i32 = arith.constant 0 : i32
    %c0_i32_0 = arith.constant 0 : i32
    %c0_i32_1 = arith.constant 0 : i32
    return %arg1, %c0_i32, %c0_i32_0 : i32, i32, i32
  }
  func.func @transform_2(%arg0: i32, %arg1: i32, %arg2: i32) -> (i32, i32, i32) {
    %c0_i32 = arith.constant 0 : i32
    %c0_i32_0 = arith.constant 0 : i32
    %c0_i32_1 = arith.constant 0 : i32
    return %arg1, %c0_i32, %c0_i32_0 : i32, i32, i32
  }
  func.func @transform_3(%arg0: i32, %arg1: i32, %arg2: i32) -> (i32, i32, i32) {
    %c0_i32 = arith.constant 0 : i32
    %c0_i32_0 = arith.constant 0 : i32
    %c0_i32_1 = arith.constant 0 : i32
    return %arg1, %c0_i32, %c0_i32_0 : i32, i32, i32
  }
  func.func @transform_4(%arg0: i32, %arg1: i32, %arg2: i32) -> (i32, i32) {
    %c0_i32 = arith.constant 0 : i32
    %c0_i32_0 = arith.constant 0 : i32
    return %arg2, %c0_i32 : i32, i32
  }
  func.func @transform_5(%arg0: i32, %arg1: i32, %arg2: i32) -> (i32, i32) {
    %c0_i32 = arith.constant 0 : i32
    %c0_i32_0 = arith.constant 0 : i32
    return %arg2, %c0_i32 : i32, i32
  }
  func.func @transform_6(%arg0: i32, %arg1: i32, %arg2: i32) -> (i32, i32, i32, i32) {
    %c0_i32 = arith.constant 0 : i32
    %c0_i32_0 = arith.constant 0 : i32
    return %arg0, %arg1, %arg2, %c0_i32 : i32, i32, i32, i32
  }
  func.func @transform_7(%arg0: i32, %arg1: i32, %arg2: i32) -> (i32, i32, i32, i32) {
    %c0_i32 = arith.constant 0 : i32
    %c0_i32_0 = arith.constant 0 : i32
    return %arg0, %arg1, %arg2, %c0_i32 : i32, i32, i32, i32
  }
  func.func @transform_8(%arg0: i32, %arg1: i32, %arg2: i32) -> (i32, i32, i32, i32) {
    %c0_i32 = arith.constant 0 : i32
    %c0_i32_0 = arith.constant 0 : i32
    return %arg0, %arg1, %arg2, %c0_i32 : i32, i32, i32, i32
  }
}

</mosaic_0001>

<llo_original>
// kernel: tpu_custom_call.1
$region0: #{tpu_custom_call.1}
  #allocation0 [shape = 'u32[]', space=smem, size = 0x4, offset = 0x4, fixed_abs, tag = 'smem constant byte address 0x4 - core index']
  #allocation1 [shape = 'u32[144,128]{1,0:T(1,128)}', space=vmem, size = 0x12000, scoped, tag = 'internal scratch']
  %s0 = inlined_call_operand.vmem [shape: f32[2,8,32], index: 0, kind: input, shape index: {}]
  %s1 = inlined_call_operand.vmem [shape: f32[4,32,8], index: 1, kind: input, shape index: {}]
  %s2 = inlined_call_operand.vmem [shape: f32[4,32,8], index: 2, kind: input, shape index: {}]
  %s3 = inlined_call_operand.vmem [shape: f32[4,32,8], index: 3, kind: input, shape index: {}]
  %s4 = inlined_call_operand.vmem [shape: f32[8,8], index: 4, kind: input, shape index: {}]
  %s5 = inlined_call_operand.vmem [shape: f32[8,8], index: 5, kind: input, shape index: {}]
  %s6 = inlined_call_operand.hbm [shape: f32[2,4,8,8], index: 6, kind: output, shape index: {0}]
  %s7 = inlined_call_operand.hbm [shape: f32[2,4,8,8], index: 7, kind: output, shape index: {1}]
  %s8 = inlined_call_operand.hbm [shape: f32[2,4,8,8], index: 8, kind: output, shape index: {2}]
  %9 = xla_tuple %s6, %s7, %s8
  %s10 = sld [smem:[#allocation0]]
  $region73: #{tpu_custom_call.1} parent=0
    _
  %s12 = ssub.s32 1, %s10
  %s13 = scalar_select 0, %s12, %s10
  $region1: #{tpu_custom_call.1} parent=0
    #allocation2 [shape = 'u8[8192]{0}', space=vmem, size = 0x2000, scoped, tag = 'output window, operand 0']
    #allocation3 [shape = 's32[2]{0}', space=sflag, size = 0x8, scoped, tag = 'scoped memory for tpu_custom_call.1']
    #allocation4 [shape = 'u8[8192]{0}', space=vmem, size = 0x2000, scoped, tag = 'output window, operand 1']
    #allocation5 [shape = 's32[2]{0}', space=sflag, size = 0x8, scoped, tag = 'scoped memory for tpu_custom_call.1']
    #allocation6 [shape = 'u8[8192]{0}', space=vmem, size = 0x2000, scoped, tag = 'output window, operand 2']
    %14 = vsyncpa [#allocation3], 0
    %s15 = scalar_lea.sflag [#allocation3], 1
    %16 = vsyncpa %s15, 0
    %17 = vsyncpa [#allocation5], 0
    %s18 = scalar_lea.sflag [#allocation5], 1
    %19 = vsyncpa %s18, 0
    loop: start=0, step=1, limit=10
    $region2: #{tpu_custom_call.1} parent=1 // loop_pre_header
      _
    $region3: #{tpu_custom_call.1} parent=1 // loop_header
      %s21 = sphi 0, %s25
      %p22 = scmp.ge.s32.totalorder %s21, 10
      %s28 = sphi 0, %s47
      %s29 = sphi 0, %s43
      %s30 = sphi 0, %s39
      %s31 = sphi 0, %s28
      %s32 = sphi 0, %s29
      %s33 = sphi 0, %s30
      %s34 = sphi 0, %s31
      %s35 = sphi 0, %s32
      %s36 = sphi 0, %s33
      %s52 = sphi 0, %s54
      %s55 = sphi 0, %s52
      %s56 = sphi 0, %s55
      %s72 = sphi 0, %s56
      %s78 = sphi 0, %s80
      %s81 = sphi 0, %s78
      %s82 = sphi 0, %s81
      %s98 = sphi 0, %s82
      %s104 = sphi 0, %s106
      %s107 = sphi 0, %s104
      %s108 = sphi 0, %s107
      %s124 = sphi 0, %s108
      %s130 = sphi 0, %s132
      %s133 = sphi 0, %s130
      %s134 = sphi 0, %s133
      %s150 = sphi 0, %s134
      %s156 = sphi 0, %s158
      %s159 = sphi 0, %s156
      %s160 = sphi 0, %s159
      %s176 = sphi 0, %s160
      %s182 = sphi 0, %s184
      %s185 = sphi 0, %s182
      %s186 = sphi 0, %s185
      %s202 = sphi 0, %s186
      %s212 = sphi 0, %s214
      %s215 = sphi 0, %s212
      %s216 = sphi 0, %s215
      %s232 = sphi 0, %s216
      %s242 = sphi 0, %s244
      %s245 = sphi 0, %s242
      %s246 = sphi 0, %s245
      %s262 = sphi 0, %s246
      %s272 = sphi 0, %s274
      %s275 = sphi 0, %s272
      %s276 = sphi 0, %s275
      %s292 = sphi 0, %s276
    $region4: #{tpu_custom_call.1} parent=1 // loop_header_branch
      %24 = sbr.rel (%p22) target = $region8
    $region5: #{tpu_custom_call.1} parent=1 // loop_body
      %s26 = ssub.s32 %s21, 1
      %s27 = ssub.s32 %s21, 2
      %s37 = sadd.s32 1, %s30
      %p38 = scmp.ge.s32.totalorder %s37, 1
      %s39 = scalar_select %p38, 0, %s37
      %s40 = sadd.s32 1, %s29
      %s41 = scalar_select %p38, %s40, %s29
      %p42 = scmp.ge.s32.totalorder %s41, 4
      %s43 = scalar_select %p42, 0, %s41
      %s44 = sadd.s32 1, %s28
      %s45 = scalar_select %p42, %s44, %s28
      %p46 = scmp.ge.s32.totalorder %s45, 2
      %s47 = scalar_select %p46, 0, %s45
      %s48 = ssub.s32 %s28, %s47
      %s49 = ssub.s32 %s30, %s39
      %s50 = sor.u32 %s48, %s49
      %p51 = scmp.eq.s32.totalorder %s50, 0
      %s53 = sadd.s32 %s52, 1
      %s54 = scalar_select %p51, %s52, %s53
      %p57 = pneg %p51
      %p58 = scmp.eq.s32.totalorder %s21, 7
      %p59 = por %p57, %p58
      %p60 = scmp.ne.s32.totalorder %s52, %s55
      %p61 = scmp.eq.s32.totalorder %s21, 0
      %p62 = por %p60, %p61
      %p63 = scmp.ne.s32.totalorder %s52, %s55
      %p64 = scmp.eq.s32.totalorder %s26, 7
      %p65 = por %p63, %p64
      %p66 = scmp.ne.s32.totalorder %s55, %s56
      %p67 = scmp.eq.s32.totalorder %s26, 0
      %p68 = por %p66, %p67
      %p69 = scmp.ne.s32.totalorder %s55, %s56
      %p70 = scmp.eq.s32.totalorder %s27, 7
      %p71 = por %p69, %p70
      %p73 = scmp.ne.s32.totalorder %s56, %s72
      %p74 = scmp.eq.s32.totalorder %s27, 0
      %p75 = por %p73, %p74
      %s76 = ssub.s32 %s29, %s43
      %p77 = scmp.eq.s32.totalorder %s76, 0
      %s79 = sadd.s32 %s78, 1
      %s80 = scalar_select %p77, %s78, %s79
      %p83 = pneg %p77
      %p84 = scmp.eq.s32.totalorder %s21, 7
      %p85 = por %p83, %p84
      %p86 = scmp.ne.s32.totalorder %s78, %s81
      %p87 = scmp.eq.s32.totalorder %s21, 0
      %p88 = por %p86, %p87
      %p89 = scmp.ne.s32.totalorder %s78, %s81
      %p90 = scmp.eq.s32.totalorder %s26, 7
      %p91 = por %p89, %p90
      %p92 = scmp.ne.s32.totalorder %s81, %s82
      %p93 = scmp.eq.s32.totalorder %s26, 0
      %p94 = por %p92, %p93
      %p95 = scmp.ne.s32.totalorder %s81, %s82
      %p96 = scmp.eq.s32.totalorder %s27, 7
      %p97 = por %p95, %p96
      %p99 = scmp.ne.s32.totalorder %s82, %s98
      %p100 = scmp.eq.s32.totalorder %s27, 0
      %p101 = por %p99, %p100
      %s102 = ssub.s32 %s29, %s43
      %p103 = scmp.eq.s32.totalorder %s102, 0
      %s105 = sadd.s32 %s104, 1
      %s106 = scalar_select %p103, %s104, %s105
      %p109 = pneg %p103
      %p110 = scmp.eq.s32.totalorder %s21, 7
      %p111 = por %p109, %p110
      %p112 = scmp.ne.s32.totalorder %s104, %s107
      %p113 = scmp.eq.s32.totalorder %s21, 0
      %p114 = por %p112, %p113
      %p115 = scmp.ne.s32.totalorder %s104, %s107
      %p116 = scmp.eq.s32.totalorder %s26, 7
      %p117 = por %p115, %p116
      %p118 = scmp.ne.s32.totalorder %s107, %s108
      %p119 = scmp.eq.s32.totalorder %s26, 0
      %p120 = por %p118, %p119
      %p121 = scmp.ne.s32.totalorder %s107, %s108
      %p122 = scmp.eq.s32.totalorder %s27, 7
      %p123 = por %p121, %p122
      %p125 = scmp.ne.s32.totalorder %s108, %s124
      %p126 = scmp.eq.s32.totalorder %s27, 0
      %p127 = por %p125, %p126
      %s128 = ssub.s32 %s29, %s43
      %p129 = scmp.eq.s32.totalorder %s128, 0
      %s131 = sadd.s32 %s130, 1
      %s132 = scalar_select %p129, %s130, %s131
      %p135 = pneg %p129
      %p136 = scmp.eq.s32.totalorder %s21, 7
      %p137 = por %p135, %p136
      %p138 = scmp.ne.s32.totalorder %s130, %s133
      %p139 = scmp.eq.s32.totalorder %s21, 0
      %p140 = por %p138, %p139
      %p141 = scmp.ne.s32.totalorder %s130, %s133
      %p142 = scmp.eq.s32.totalorder %s26, 7
      %p143 = por %p141, %p142
      %p144 = scmp.ne.s32.totalorder %s133, %s134
      %p145 = scmp.eq.s32.totalorder %s26, 0
      %p146 = por %p144, %p145
      %p147 = scmp.ne.s32.totalorder %s133, %s134
      %p148 = scmp.eq.s32.totalorder %s27, 7
      %p149 = por %p147, %p148
      %p151 = scmp.ne.s32.totalorder %s134, %s150
      %p152 = scmp.eq.s32.totalorder %s27, 0
      %p153 = por %p151, %p152
      %s154 = ssub.s32 %s30, %s39
      %p155 = scmp.eq.s32.totalorder %s154, 0
      %s157 = sadd.s32 %s156, 1
      %s158 = scalar_select %p155, %s156, %s157
      %p161 = pneg %p155
      %p162 = scmp.eq.s32.totalorder %s21, 7
      %p163 = por %p161, %p162
      %p164 = scmp.ne.s32.totalorder %s156, %s159
      %p165 = scmp.eq.s32.totalorder %s21, 0
      %p166 = por %p164, %p165
      %p167 = scmp.ne.s32.totalorder %s156, %s159
      %p168 = scmp.eq.s32.totalorder %s26, 7
      %p169 = por %p167, %p168
      %p170 = scmp.ne.s32.totalorder %s159, %s160
      %p171 = scmp.eq.s32.totalorder %s26, 0
      %p172 = por %p170, %p171
      %p173 = scmp.ne.s32.totalorder %s159, %s160
      %p174 = scmp.eq.s32.totalorder %s27, 7
      %p175 = por %p173, %p174
      %p177 = scmp.ne.s32.totalorder %s160, %s176
      %p178 = scmp.eq.s32.totalorder %s27, 0
      %p179 = por %p177, %p178
      %s180 = ssub.s32 %s30, %s39
      %p181 = scmp.eq.s32.totalorder %s180, 0
      %s183 = sadd.s32 %s182, 1
      %s184 = scalar_select %p181, %s182, %s183
      %p187 = pneg %p181
      %p188 = scmp.eq.s32.totalorder %s21, 7
      %p189 = por %p187, %p188
      %p190 = scmp.ne.s32.totalorder %s182, %s185
      %p191 = scmp.eq.s32.totalorder %s21, 0
      %p192 = por %p190, %p191
      %p193 = scmp.ne.s32.totalorder %s182, %s185
      %p194 = scmp.eq.s32.totalorder %s26, 7
      %p195 = por %p193, %p194
      %p196 = scmp.ne.s32.totalorder %s185, %s186
      %p197 = scmp.eq.s32.totalorder %s26, 0
      %p198 = por %p196, %p197
      %p199 = scmp.ne.s32.totalorder %s185, %s186
      %p200 = scmp.eq.s32.totalorder %s27, 7
      %p201 = por %p199, %p200
      %p203 = scmp.ne.s32.totalorder %s186, %s202
      %p204 = scmp.eq.s32.totalorder %s27, 0
      %p205 = por %p203, %p204
      %s206 = ssub.s32 %s28, %s47
      %s207 = ssub.s32 %s29, %s43
      %s208 = sor.u32 %s206, %s207
      %s209 = ssub.s32 %s30, %s39
      %s210 = sor.u32 %s208, %s209
      %p211 = scmp.eq.s32.totalorder %s210, 0
      %s213 = sadd.s32 %s212, 1
      %s214 = scalar_select %p211, %s212, %s213
      %p217 = pneg %p211
      %p218 = scmp.eq.s32.totalorder %s21, 7
      %p219 = por %p217, %p218
      %p220 = scmp.ne.s32.totalorder %s212, %s215
      %p221 = scmp.eq.s32.totalorder %s21, 0
      %p222 = por %p220, %p221
      %p223 = scmp.ne.s32.totalorder %s212, %s215
      %p224 = scmp.eq.s32.totalorder %s26, 7
      %p225 = por %p223, %p224
      %p226 = scmp.ne.s32.totalorder %s215, %s216
      %p227 = scmp.eq.s32.totalorder %s26, 0
      %p228 = por %p226, %p227
      %p229 = scmp.ne.s32.totalorder %s215, %s216
      %p230 = scmp.eq.s32.totalorder %s27, 7
      %p231 = por %p229, %p230
      %p233 = scmp.ne.s32.totalorder %s216, %s232
      %p234 = scmp.eq.s32.totalorder %s27, 0
      %p235 = por %p233, %p234
      %s236 = ssub.s32 %s28, %s47
      %s237 = ssub.s32 %s29, %s43
      %s238 = sor.u32 %s236, %s237
      %s239 = ssub.s32 %s30, %s39
      %s240 = sor.u32 %s238, %s239
      %p241 = scmp.eq.s32.totalorder %s240, 0
      %s243 = sadd.s32 %s242, 1
      %s244 = scalar_select %p241, %s242, %s243
      %p247 = pneg %p241
      %p248 = scmp.eq.s32.totalorder %s21, 7
      %p249 = por %p247, %p248
      %p250 = scmp.ne.s32.totalorder %s242, %s245
      %p251 = scmp.eq.s32.totalorder %s21, 0
      %p252 = por %p250, %p251
      %p253 = scmp.ne.s32.totalorder %s242, %s245
      %p254 = scmp.eq.s32.totalorder %s26, 7
      %p255 = por %p253, %p254
      %p256 = scmp.ne.s32.totalorder %s245, %s246
      %p257 = scmp.eq.s32.totalorder %s26, 0
      %p258 = por %p256, %p257
      %p259 = scmp.ne.s32.totalorder %s245, %s246
      %p260 = scmp.eq.s32.totalorder %s27, 7
      %p261 = por %p259, %p260
      %p263 = scmp.ne.s32.totalorder %s246, %s262
      %p264 = scmp.eq.s32.totalorder %s27, 0
      %p265 = por %p263, %p264
      %s266 = ssub.s32 %s28, %s47
      %s267 = ssub.s32 %s29, %s43
      %s268 = sor.u32 %s266, %s267
      %s269 = ssub.s32 %s30, %s39
      %s270 = sor.u32 %s268, %s269
      %p271 = scmp.eq.s32.totalorder %s270, 0
      %s273 = sadd.s32 %s272, 1
      %s274 = scalar_select %p271, %s272, %s273
      %p277 = pneg %p271
      %p278 = scmp.eq.s32.totalorder %s21, 7
      %p279 = por %p277, %p278
      %p280 = scmp.ne.s32.totalorder %s272, %s275
      %p281 = scmp.eq.s32.totalorder %s21, 0
      %p282 = por %p280, %p281
      %p283 = scmp.ne.s32.totalorder %s272, %s275
      %p284 = scmp.eq.s32.totalorder %s26, 7
      %p285 = por %p283, %p284
      %p286 = scmp.ne.s32.totalorder %s275, %s276
      %p287 = scmp.eq.s32.totalorder %s26, 0
      %p288 = por %p286, %p287
      %p289 = scmp.ne.s32.totalorder %s275, %s276
      %p290 = scmp.eq.s32.totalorder %s27, 7
      %p291 = por %p289, %p290
      %p293 = scmp.ne.s32.totalorder %s276, %s292
      %p294 = scmp.eq.s32.totalorder %s27, 0
      %p295 = por %p293, %p294
      %p296 = scmp.le.s32.totalorder 1, %s21
      %p297 = scmp.lt.s32.totalorder %s21, 9
      %p298 = pnand %p296, %p297
      %p299 = pneg %p298
      // Predicated region
      $region9: #{tpu_custom_call.1} parent=5 // pred_check
        _
      $region10: #{tpu_custom_call.1} parent=5 // pred_check_branch
        %301 = sbr.rel (%p298) target = $region12
      $region11: #{tpu_custom_call.1} parent=5 // pred_region
        %s302 = ssub.s32 %s21, 1
        // Predicated region
        $region13: #{tpu_custom_call.1} parent=11 // pred_check
          %p303 = pneg %p172
        $region14: #{tpu_custom_call.1} parent=11 // pred_check_branch
          %305 = sbr.rel (%p303) target = $region16
        $region15: #{tpu_custom_call.1} parent=11 // pred_region
          %p306 = scmp.lt.s32.totalorder %s33, 0
          %s307 = scalar_select %p306, %s33, 0
          %s308 = smul.addr %s307, 8
          %s309 = scalar_lea.vmem %s4, %s308
        $region16: #{tpu_custom_call.1} parent=11 // pred_fallthru
          _
        // Predicated region
        $region17: #{tpu_custom_call.1} parent=11 // pred_check
          %p310 = pneg %p198
        $region18: #{tpu_custom_call.1} parent=11 // pred_check_branch
          %312 = sbr.rel (%p310) target = $region20
        $region19: #{tpu_custom_call.1} parent=11 // pred_region
          %p313 = scmp.lt.s32.totalorder %s33, 0
          %s314 = scalar_select %p313, %s33, 0
          %s315 = smul.addr %s314, 8
          %s316 = scalar_lea.vmem %s5, %s315
        $region20: #{tpu_custom_call.1} parent=11 // pred_fallthru
          _
      $region12: #{tpu_custom_call.1} parent=5 // pred_fallthru
        _
      %p317 = scmp.lt.s32.totalorder %s21, 8
      // Predicated region
      $region21: #{tpu_custom_call.1} parent=5 // pred_check
        %p318 = pneg %p317
      $region22: #{tpu_custom_call.1} parent=5 // pred_check_branch
        %320 = sbr.rel (%p318) target = $region24
      $region23: #{tpu_custom_call.1} parent=5 // pred_region
        // Predicated region
        $region25: #{tpu_custom_call.1} parent=23 // pred_check
          %p321 = pneg %p62
        $region26: #{tpu_custom_call.1} parent=23 // pred_check_branch
          %323 = sbr.rel (%p321) target = $region28
        $region27: #{tpu_custom_call.1} parent=23 // pred_region
          %p324 = scmp.lt.s32.totalorder %s28, 1
          %s325 = scalar_select %p324, %s28, 1
          %p326 = scmp.lt.s32.totalorder %s30, 0
          %s327 = scalar_select %p326, %s30, 0
          %s328 = sadd.s32 %s327, %s325
          %s329 = smul.addr %s328, 8
          %s330 = scalar_lea.vmem %s0, %s329
        $region28: #{tpu_custom_call.1} parent=23 // pred_fallthru
          _
        // Predicated region
        $region29: #{tpu_custom_call.1} parent=23 // pred_check
          %p331 = pneg %p88
        $region30: #{tpu_custom_call.1} parent=23 // pred_check_branch
          %333 = sbr.rel (%p331) target = $region32
        $region31: #{tpu_custom_call.1} parent=23 // pred_region
          %p334 = scmp.lt.s32.totalorder %s29, 3
          %s335 = scalar_select %p334, %s29, 3
          %s336 = smul.addr %s335, 4
          %s337 = smul.addr %s336, 8
          %s338 = scalar_lea.vmem %s1, %s337
        $region32: #{tpu_custom_call.1} parent=23 // pred_fallthru
          _
        // Predicated region
        $region33: #{tpu_custom_call.1} parent=23 // pred_check
          %p339 = pneg %p114
        $region34: #{tpu_custom_call.1} parent=23 // pred_check_branch
          %341 = sbr.rel (%p339) target = $region36
        $region35: #{tpu_custom_call.1} parent=23 // pred_region
          %p342 = scmp.lt.s32.totalorder %s29, 3
          %s343 = scalar_select %p342, %s29, 3
          %s344 = smul.addr %s343, 4
          %s345 = smul.addr %s344, 8
          %s346 = scalar_lea.vmem %s2, %s345
        $region36: #{tpu_custom_call.1} parent=23 // pred_fallthru
          _
        // Predicated region
        $region37: #{tpu_custom_call.1} parent=23 // pred_check
          %p347 = pneg %p140
        $region38: #{tpu_custom_call.1} parent=23 // pred_check_branch
          %349 = sbr.rel (%p347) target = $region40
        $region39: #{tpu_custom_call.1} parent=23 // pred_region
          %p350 = scmp.lt.s32.totalorder %s29, 3
          %s351 = scalar_select %p350, %s29, 3
          %s352 = smul.addr %s351, 4
          %s353 = smul.addr %s352, 8
          %s354 = scalar_lea.vmem %s3, %s353
        $region40: #{tpu_custom_call.1} parent=23 // pred_fallthru
          _
      $region24: #{tpu_custom_call.1} parent=5 // pred_fallthru
        _
      %p355 = scmp.le.s32.totalorder 1, %s21
      %p356 = scmp.lt.s32.totalorder %s21, 9
      %p357 = pnand %p355, %p356
      %p358 = pneg %p357
      // Predicated region
      $region41: #{tpu_custom_call.1} parent=5 // pred_check
        _
      $region42: #{tpu_custom_call.1} parent=5 // pred_check_branch
        %360 = sbr.rel (%p357) target = $region44
      $region43: #{tpu_custom_call.1} parent=5 // pred_region
        %s361 = ssub.s32 %s21, 1
        %p362 = scmp.lt.s32.totalorder %s31, 1
        %s363 = scalar_select %p362, %s31, 1
        %p364 = scmp.lt.s32.totalorder %s33, 0
        %s365 = scalar_select %p364, %s33, 0
        %s366 = sadd.s32 %s365, %s363
        %s367 = smul.addr %s366, 8
        %s368 = scalar_lea.vmem %s0, %s367
        %p369 = pneg %p68
        %p370 = pneg %p65
        %p371 = scmp.lt.s32.totalorder %s32, 3
        %s372 = scalar_select %p371, %s32, 3
        %s373 = smul.addr %s372, 4
        %s374 = smul.addr %s373, 8
        %s375 = scalar_lea.vmem %s1, %s374
        %p376 = pneg %p94
        %p377 = pneg %p91
        %p378 = scmp.lt.s32.totalorder %s32, 3
        %s379 = scalar_select %p378, %s32, 3
        %s380 = smul.addr %s379, 4
        %s381 = smul.addr %s380, 8
        %s382 = scalar_lea.vmem %s2, %s381
        %p383 = pneg %p120
        %p384 = pneg %p117
        %p385 = scmp.lt.s32.totalorder %s32, 3
        %s386 = scalar_select %p385, %s32, 3
        %s387 = smul.addr %s386, 4
        %s388 = smul.addr %s387, 8
        %s389 = scalar_lea.vmem %s3, %s388
        %p390 = pneg %p146
        %p391 = pneg %p143
        %p392 = scmp.lt.s32.totalorder %s33, 0
        %s393 = scalar_select %p392, %s33, 0
        %s394 = smul.addr %s393, 8
        %s395 = scalar_lea.vmem %s4, %s394
        %p396 = pneg %p172
        %p397 = pneg %p169
        %p398 = scmp.lt.s32.totalorder %s33, 0
        %s399 = scalar_select %p398, %s33, 0
        %s400 = smul.addr %s399, 8
        %s401 = scalar_lea.vmem %s5, %s400
        %p402 = pneg %p198
        %p403 = pneg %p195
        %p404 = pneg %p228
        %p405 = pneg %p225
        %s406 = sand.u32 %s215, 1
        %s407 = scalar_lea.sflag [#allocation3], %s406
        %s408 = sand.u32 %s215, 1
        %s409 = smul.addr %s408, 8
        %s410 = scalar_lea.vmem [#allocation2], %s409
        %p411 = pneg %p258
        %p412 = pneg %p255
        %s413 = sand.u32 %s26, 1
        %s414 = scalar_lea.sflag [#allocation5], %s413
        %s415 = sand.u32 %s245, 1
        %s416 = smul.addr %s415, 8
        %s417 = scalar_lea.vmem [#allocation4], %s416
        %p418 = pneg %p288
        %p419 = pneg %p285
        %s420 = sand.u32 %s26, 1
        %s421 = scalar_lea.sflag [#allocation5], %s420
        %s422 = sand.u32 %s275, 1
        %s423 = smul.addr %s422, 8
        %s424 = scalar_lea.vmem [#allocation6], %s423
        %p425 = scmp.lt.s32.totalorder %s31, 1
        %s426 = scalar_select %p425, %s31, 1
        %p427 = scmp.lt.s32.totalorder %s33, 0
        %s428 = scalar_select %p427, %s33, 0
        %s429 = sadd.s32 %s428, %s426
        %s430 = smul.addr %s429, 8
        %s431 = scalar_lea.vmem %s0, %s430
        %p432 = scmp.lt.s32.totalorder %s32, 3
        %s433 = scalar_select %p432, %s32, 3
        %s434 = smul.addr %s433, 4
        %s435 = smul.addr %s434, 8
        %s436 = scalar_lea.vmem %s1, %s435
        %p437 = scmp.lt.s32.totalorder %s32, 3
        %s438 = scalar_select %p437, %s32, 3
        %s439 = smul.addr %s438, 4
        %s440 = smul.addr %s439, 8
        %s441 = scalar_lea.vmem %s2, %s440
        %p442 = scmp.lt.s32.totalorder %s32, 3
        %s443 = scalar_select %p442, %s32, 3
        %s444 = smul.addr %s443, 4
        %s445 = smul.addr %s444, 8
        %s446 = scalar_lea.vmem %s3, %s445
        %p447 = scmp.lt.s32.totalorder %s33, 0
        %s448 = scalar_select %p447, %s33, 0
        %s449 = smul.addr %s448, 8
        %s450 = scalar_lea.vmem %s4, %s449
        %p451 = scmp.lt.s32.totalorder %s33, 0
        %s452 = scalar_select %p451, %s33, 0
        %s453 = smul.addr %s452, 8
        %s454 = scalar_lea.vmem %s5, %s453
        %v455 = vld [vmem:[%s431] sm:$0xff]
        %v456 = vld [vmem:[%s450] sm:$0xff]
        %v457 = vld [vmem:[%s454] sm:$0xff]
        %v458 = vld [vmem:[%s436] sm:$0xff]
        %v459 = vld [vmem:[%s436 + $0x8] sm:$0xff]
        %v460 = vld [vmem:[%s436 + $0x10] sm:$0xff]
        %v461 = vld [vmem:[%s436 + $0x18] sm:$0xff]
        %vm462 = vcmask 261120
        %v464 = vsel %vm462, %v455, 0
        %466 = vmatprep.subr.mxu0 0.0
        %467 = vmatpush1.msra.mxu0 0.0
        %468 = vmatprep.subr.mxu0 0.0
        %469 = vmatpush1.msra.mxu0 0.0
        %470 = vmatprep.subr.mxu0 0.0
        %471 = vmatpush1.msra.mxu0 0.0
        %472 = vmatprep.subr.mxu0 0.0
        %473 = vmatpush1.msra.mxu0 0.0
        %474 = vmatprep.subr.mxu0 0.0
        %475 = vmatpush1.msra.mxu0 0.0
        %476 = vmatprep.subr.mxu0 0.0
        %477 = vmatpush1.msra.mxu0 0.0
        %478 = vmatprep.subr.mxu0 0.0
        %479 = vmatpush1.msra.mxu0 0.0
        %480 = vmatprep.subr.mxu0 0.0
        %481 = vmatpush1.msra.mxu0 0.0
        %482 = vmatprep.subr.mxu0 0.0
        %483 = vmatpush1.msra.mxu0 0.0
        %484 = vmatprep.subr.mxu0 0.0
        %485 = vmatpush1.msra.mxu0 0.0
        %486 = vmatprep.subr.mxu0 0.0
        %487 = vmatpush1.msra.mxu0 0.0
        %488 = vmatprep.subr.mxu0 0.0
        %489 = vmatpush1.msra.mxu0 0.0
        %490 = vmatprep.subr.mxu0 0.0
        %491 = vmatpush1.msra.mxu0 %v461
        %492 = vmatprep.subr.mxu0 0.0
        %493 = vmatpush1.msra.mxu0 %v460
        %494 = vmatprep.subr.mxu0 0.0
        %495 = vmatpush1.msra.mxu0 %v459
        %496 = vmatprep.subr.mxu0 0.0
        %497 = vmatpush1.msra.mxu0 %v458
        %498 = vmatprep.subr.mxu0 0.0
        %499 = vmatpush2.msra.mxu0 0.0
        %500 = vmatprep.subr.mxu0 0.0
        %501 = vmatpush2.msra.mxu0 0.0
        %502 = vmatprep.subr.mxu0 0.0
        %503 = vmatpush2.msra.mxu0 0.0
        %504 = vmatprep.subr.mxu0 0.0
        %505 = vmatpush2.msra.mxu0 0.0
        %506 = vmatprep.subr.mxu0 0.0
        %507 = vmatpush2.msra.mxu0 0.0
        %508 = vmatprep.subr.mxu0 0.0
        %509 = vmatpush2.msra.mxu0 0.0
        %510 = vmatprep.subr.mxu0 0.0
        %511 = vmatpush2.msra.mxu0 0.0
        %512 = vmatprep.subr.mxu0 0.0
        %513 = vmatpush2.msra.mxu0 0.0
        %514 = vmatprep.subr.mxu0 0.0
        %515 = vmatpush2.msra.mxu0 0.0
        %516 = vmatprep.subr.mxu0 0.0
        %517 = vmatpush2.msra.mxu0 0.0
        %518 = vmatprep.subr.mxu0 0.0
        %519 = vmatpush2.msra.mxu0 0.0
        %520 = vmatprep.subr.mxu0 0.0
        %521 = vmatpush2.msra.mxu0 0.0
        %522 = vmatprep.subr.mxu0 0.0
        %523 = vmatpush2.msra.mxu0 0.0
        %524 = vmatprep.subr.mxu0 0.0
        %525 = vmatpush2.msra.mxu0 0.0
        %526 = vmatprep.subr.mxu0 0.0
        %527 = vmatpush2.msra.mxu0 0.0
        %528 = vmatprep.subr.mxu0 0.0
        %529 = vmatpush2.msra.mxu0 0.0
        %530 = vmatprep.mubr.f32.mxu0 0.0
        %531 = vmatmul.mubr.f32.gmra.mxu0 %v464
        %v532 = vpop.f32.mrf.mxu0
        %v533 = vadd.f32 0.0, %v532
        %v534 = vpop.f32.mrf.mxu0
        %535 = vdwg.mxu0
        %v536 = vld [vmem:[%s441] sm:$0xff]
        %v537 = vld [vmem:[%s441 + $0x8] sm:$0xff]
        %v538 = vld [vmem:[%s441 + $0x10] sm:$0xff]
        %v539 = vld [vmem:[%s441 + $0x18] sm:$0xff]
        %540 = vmatprep.subr.mxu0 0.0
        %541 = vmatpush1.msra.mxu0 0.0
        %542 = vmatprep.subr.mxu0 0.0
        %543 = vmatpush1.msra.mxu0 0.0
        %544 = vmatprep.subr.mxu0 0.0
        %545 = vmatpush1.msra.mxu0 0.0
        %546 = vmatprep.subr.mxu0 0.0
        %547 = vmatpush1.msra.mxu0 0.0
        %548 = vmatprep.subr.mxu0 0.0
        %549 = vmatpush1.msra.mxu0 0.0
        %550 = vmatprep.subr.mxu0 0.0
        %551 = vmatpush1.msra.mxu0 0.0
        %552 = vmatprep.subr.mxu0 0.0
        %553 = vmatpush1.msra.mxu0 0.0
        %554 = vmatprep.subr.mxu0 0.0
        %555 = vmatpush1.msra.mxu0 0.0
        %556 = vmatprep.subr.mxu0 0.0
        %557 = vmatpush1.msra.mxu0 0.0
        %558 = vmatprep.subr.mxu0 0.0
        %559 = vmatpush1.msra.mxu0 0.0
        %560 = vmatprep.subr.mxu0 0.0
        %561 = vmatpush1.msra.mxu0 0.0
        %562 = vmatprep.subr.mxu0 0.0
        %563 = vmatpush1.msra.mxu0 0.0
        %564 = vmatprep.subr.mxu0 0.0
        %565 = vmatpush1.msra.mxu0 %v539
        %566 = vmatprep.subr.mxu0 0.0
        %567 = vmatpush1.msra.mxu0 %v538
        %568 = vmatprep.subr.mxu0 0.0
        %569 = vmatpush1.msra.mxu0 %v537
        %570 = vmatprep.subr.mxu0 0.0
        %571 = vmatpush1.msra.mxu0 %v536
        %572 = vmatprep.subr.mxu0 0.0
        %573 = vmatpush2.msra.mxu0 0.0
        %574 = vmatprep.subr.mxu0 0.0
        %575 = vmatpush2.msra.mxu0 0.0
        %576 = vmatprep.subr.mxu0 0.0
        %577 = vmatpush2.msra.mxu0 0.0
        %578 = vmatprep.subr.mxu0 0.0
        %579 = vmatpush2.msra.mxu0 0.0
        %580 = vmatprep.subr.mxu0 0.0
        %581 = vmatpush2.msra.mxu0 0.0
        %582 = vmatprep.subr.mxu0 0.0
        %583 = vmatpush2.msra.mxu0 0.0
        %584 = vmatprep.subr.mxu0 0.0
        %585 = vmatpush2.msra.mxu0 0.0
        %586 = vmatprep.subr.mxu0 0.0
        %587 = vmatpush2.msra.mxu0 0.0
        %588 = vmatprep.subr.mxu0 0.0
        %589 = vmatpush2.msra.mxu0 0.0
        %590 = vmatprep.subr.mxu0 0.0
        %591 = vmatpush2.msra.mxu0 0.0
        %592 = vmatprep.subr.mxu0 0.0
        %593 = vmatpush2.msra.mxu0 0.0
        %594 = vmatprep.subr.mxu0 0.0
        %595 = vmatpush2.msra.mxu0 0.0
        %596 = vmatprep.subr.mxu0 0.0
        %597 = vmatpush2.msra.mxu0 0.0
        %598 = vmatprep.subr.mxu0 0.0
        %599 = vmatpush2.msra.mxu0 0.0
        %600 = vmatprep.subr.mxu0 0.0
        %601 = vmatpush2.msra.mxu0 0.0
        %602 = vmatprep.subr.mxu0 0.0
        %603 = vmatpush2.msra.mxu0 0.0
        %604 = vmatprep.mubr.f32.mxu0 0.0
        %605 = vmatmul.mubr.f32.gmra.mxu0 %v464
        %v606 = vpop.f32.mrf.mxu0
        %v607 = vadd.f32 0.0, %v606
        %v608 = vpop.f32.mrf.mxu0
        %609 = vdwg.mxu0
        %v610 = vld [vmem:[%s446] sm:$0xff]
        %v611 = vld [vmem:[%s446 + $0x8] sm:$0xff]
        %v612 = vld [vmem:[%s446 + $0x10] sm:$0xff]
        %v613 = vld [vmem:[%s446 + $0x18] sm:$0xff]
        %614 = vmatprep.subr.mxu0 0.0
        %615 = vmatpush1.msra.mxu0 0.0
        %616 = vmatprep.subr.mxu0 0.0
        %617 = vmatpush1.msra.mxu0 0.0
        %618 = vmatprep.subr.mxu0 0.0
        %619 = vmatpush1.msra.mxu0 0.0
        %620 = vmatprep.subr.mxu0 0.0
        %621 = vmatpush1.msra.mxu0 0.0
        %622 = vmatprep.subr.mxu0 0.0
        %623 = vmatpush1.msra.mxu0 0.0
        %624 = vmatprep.subr.mxu0 0.0
        %625 = vmatpush1.msra.mxu0 0.0
        %626 = vmatprep.subr.mxu0 0.0
        %627 = vmatpush1.msra.mxu0 0.0
        %628 = vmatprep.subr.mxu0 0.0
        %629 = vmatpush1.msra.mxu0 0.0
        %630 = vmatprep.subr.mxu0 0.0
        %631 = vmatpush1.msra.mxu0 0.0
        %632 = vmatprep.subr.mxu0 0.0
        %633 = vmatpush1.msra.mxu0 0.0
        %634 = vmatprep.subr.mxu0 0.0
        %635 = vmatpush1.msra.mxu0 0.0
        %636 = vmatprep.subr.mxu0 0.0
        %637 = vmatpush1.msra.mxu0 0.0
        %638 = vmatprep.subr.mxu0 0.0
        %639 = vmatpush1.msra.mxu0 %v613
        %640 = vmatprep.subr.mxu0 0.0
        %641 = vmatpush1.msra.mxu0 %v612
        %642 = vmatprep.subr.mxu0 0.0
        %643 = vmatpush1.msra.mxu0 %v611
        %644 = vmatprep.subr.mxu0 0.0
        %645 = vmatpush1.msra.mxu0 %v610
        %646 = vmatprep.subr.mxu0 0.0
        %647 = vmatpush2.msra.mxu0 0.0
        %648 = vmatprep.subr.mxu0 0.0
        %649 = vmatpush2.msra.mxu0 0.0
        %650 = vmatprep.subr.mxu0 0.0
        %651 = vmatpush2.msra.mxu0 0.0
        %652 = vmatprep.subr.mxu0 0.0
        %653 = vmatpush2.msra.mxu0 0.0
        %654 = vmatprep.subr.mxu0 0.0
        %655 = vmatpush2.msra.mxu0 0.0
        %656 = vmatprep.subr.mxu0 0.0
        %657 = vmatpush2.msra.mxu0 0.0
        %658 = vmatprep.subr.mxu0 0.0
        %659 = vmatpush2.msra.mxu0 0.0
        %660 = vmatprep.subr.mxu0 0.0
        %661 = vmatpush2.msra.mxu0 0.0
        %662 = vmatprep.subr.mxu0 0.0
        %663 = vmatpush2.msra.mxu0 0.0
        %664 = vmatprep.subr.mxu0 0.0
        %665 = vmatpush2.msra.mxu0 0.0
        %666 = vmatprep.subr.mxu0 0.0
        %667 = vmatpush2.msra.mxu0 0.0
        %668 = vmatprep.subr.mxu0 0.0
        %669 = vmatpush2.msra.mxu0 0.0
        %670 = vmatprep.subr.mxu0 0.0
        %671 = vmatpush2.msra.mxu0 0.0
        %672 = vmatprep.subr.mxu0 0.0
        %673 = vmatpush2.msra.mxu0 0.0
        %674 = vmatprep.subr.mxu0 0.0
        %675 = vmatpush2.msra.mxu0 0.0
        %676 = vmatprep.subr.mxu0 0.0
        %677 = vmatpush2.msra.mxu0 0.0
        %678 = vmatprep.mubr.f32.mxu0 0.0
        %679 = vmatmul.mubr.f32.gmra.mxu0 %v464
        %v680 = vpop.f32.mrf.mxu0
        %v681 = vadd.f32 0.0, %v680
        %v682 = vpop.f32.mrf.mxu0
        %683 = vdwg.mxu0
        %v684 = vmul.f32 %v533, %v457
        %686 = vrot.lane.b32.xlu0 %v533, 124
        %v687 = vpop.permute.xlu0 %686
        %689 = vrot.lane.b32.xlu0 %v533, 4
        %v690 = vpop.permute.xlu0 %689
        %vm692 = vcmask 31744
        %v693 = vsel %vm692, %v687, %v690
        %v694 = vmul.f32 %v693, %v456
        %v695 = vadd.f32 %v684, %v694
        %vm696 = vcmask 64512
        %697 = vst.msk [vmem:[%s410] sm:$0xff] %vm696, %v695
        %v698 = vmul.f32 %v607, %v457
        %700 = vrot.lane.b32.xlu0 %v607, 124
        %v701 = vpop.permute.xlu0 %700
        %703 = vrot.lane.b32.xlu0 %v607, 4
        %v704 = vpop.permute.xlu0 %703
        %v706 = vsel %vm692, %v701, %v704
        %v707 = vmul.f32 %v706, %v456
        %v708 = vadd.f32 %v698, %v707
        %709 = vst.msk [vmem:[%s417] sm:$0xff] %vm696, %v708
        %710 = vst.msk [vmem:[%s424] sm:$0xff] %vm696, %v681
        %s711 = sand.u32 %s215, 1
        %s712 = scalar_lea.sflag [#allocation3], %s711
        %s713 = sand.u32 %s215, 1
        %s714 = smul.addr %s713, 8
        %s715 = scalar_lea.vmem [#allocation2], %s714
        %s716 = sand.u32 %s26, 1
        %s717 = scalar_lea.sflag [#allocation5], %s716
        %s718 = sand.u32 %s245, 1
        %s719 = smul.addr %s718, 8
        %s720 = scalar_lea.vmem [#allocation4], %s719
        %s721 = sand.u32 %s26, 1
        %s722 = scalar_lea.sflag [#allocation5], %s721
        %s723 = sand.u32 %s275, 1
        %s724 = smul.addr %s723, 8
        %s725 = scalar_lea.vmem [#allocation6], %s724
        // Predicated region
        $region45: #{tpu_custom_call.1} parent=43 // pred_check
          %p726 = pneg %p225
        $region46: #{tpu_custom_call.1} parent=43 // pred_check_branch
          %728 = sbr.rel (%p726) target = $region48
        $region47: #{tpu_custom_call.1} parent=43 // pred_region
          %s730 = ssub.s32 128, 128
          %731 = vsyncadd %s712, %s730
          %s732 = sadd.s32 %s33, %s32
          %s733 = smul.addr %s31, 4
          %s734 = sadd.s32 %s732, %s733
          %s735 = smul.addr %s734, 128
          %s736 = scalar_lea.hbm %s6, %s735
          %s738 = sshll.u32 %s715, 4
          %s739 = int_to_ptr.vmem [resolvable:$true] %s738
          %741 = dma.vmem_to_hbm [thread:$0]  %s739, 128, %s736, %s712
        $region48: #{tpu_custom_call.1} parent=43 // pred_fallthru
          _
        // Predicated region
        $region49: #{tpu_custom_call.1} parent=43 // pred_check
          %p742 = pneg %p255
        $region50: #{tpu_custom_call.1} parent=43 // pred_check_branch
          %744 = sbr.rel (%p742) target = $region52
        $region51: #{tpu_custom_call.1} parent=43 // pred_region
          %s746 = ssub.s32 128, 128
          %747 = vsyncadd %s717, %s746
          %s748 = sadd.s32 %s33, %s32
          %s749 = smul.addr %s31, 4
          %s750 = sadd.s32 %s748, %s749
          %s751 = smul.addr %s750, 128
          %s752 = scalar_lea.hbm %s7, %s751
          %s754 = sshll.u32 %s720, 4
          %s755 = int_to_ptr.vmem [resolvable:$true] %s754
          %757 = dma.vmem_to_hbm [thread:$0]  %s755, 128, %s752, %s717
        $region52: #{tpu_custom_call.1} parent=43 // pred_fallthru
          _
        // Predicated region
        $region53: #{tpu_custom_call.1} parent=43 // pred_check
          %p758 = pneg %p285
        $region54: #{tpu_custom_call.1} parent=43 // pred_check_branch
          %760 = sbr.rel (%p758) target = $region56
        $region55: #{tpu_custom_call.1} parent=43 // pred_region
          %s762 = ssub.s32 128, 128
          %763 = vsyncadd %s722, %s762
          %s764 = sadd.s32 %s33, %s32
          %s765 = smul.addr %s31, 4
          %s766 = sadd.s32 %s764, %s765
          %s767 = smul.addr %s766, 128
          %s768 = scalar_lea.hbm %s8, %s767
          %s770 = sshll.u32 %s725, 4
          %s771 = int_to_ptr.vmem [resolvable:$true] %s770
          %773 = dma.vmem_to_hbm [thread:$0]  %s771, 128, %s768, %s722
        $region56: #{tpu_custom_call.1} parent=43 // pred_fallthru
          _
      $region44: #{tpu_custom_call.1} parent=5 // pred_fallthru
        _
      %p774 = scmp.le.s32.totalorder 2, %s21
      // Predicated region
      $region57: #{tpu_custom_call.1} parent=5 // pred_check
        %p775 = pneg %p774
      $region58: #{tpu_custom_call.1} parent=5 // pred_check_branch
        %777 = sbr.rel (%p775) target = $region60
      $region59: #{tpu_custom_call.1} parent=5 // pred_region
        %s778 = ssub.s32 %s21, 2
        // Predicated region
        $region61: #{tpu_custom_call.1} parent=59 // pred_check
          %p779 = pneg %p231
        $region62: #{tpu_custom_call.1} parent=59 // pred_check_branch
          %781 = sbr.rel (%p779) target = $region64
        $region63: #{tpu_custom_call.1} parent=59 // pred_region
          %s782 = sand.u32 %s216, 1
          %s783 = scalar_lea.sflag [#allocation3], %s782
          %s784 = sand.u32 %s216, 1
          %s785 = smul.addr %s784, 8
          %s786 = scalar_lea.vmem [#allocation2], %s785
          %787 = dma.done %s783, 128
        $region64: #{tpu_custom_call.1} parent=59 // pred_fallthru
          _
        // Predicated region
        $region65: #{tpu_custom_call.1} parent=59 // pred_check
          %p788 = pneg %p261
        $region66: #{tpu_custom_call.1} parent=59 // pred_check_branch
          %790 = sbr.rel (%p788) target = $region68
        $region67: #{tpu_custom_call.1} parent=59 // pred_region
          %s791 = sand.u32 %s27, 1
          %s792 = scalar_lea.sflag [#allocation5], %s791
          %s793 = sand.u32 %s246, 1
          %s794 = smul.addr %s793, 8
          %s795 = scalar_lea.vmem [#allocation4], %s794
          %796 = dma.done %s792, 128
        $region68: #{tpu_custom_call.1} parent=59 // pred_fallthru
          _
        // Predicated region
        $region69: #{tpu_custom_call.1} parent=59 // pred_check
          %p797 = pneg %p291
        $region70: #{tpu_custom_call.1} parent=59 // pred_check_branch
          %799 = sbr.rel (%p797) target = $region72
        $region71: #{tpu_custom_call.1} parent=59 // pred_region
          %s800 = sand.u32 %s27, 1
          %s801 = scalar_lea.sflag [#allocation5], %s800
          %s802 = sand.u32 %s276, 1
          %s803 = smul.addr %s802, 8
          %s804 = scalar_lea.vmem [#allocation6], %s803
          %805 = dma.done %s801, 128
        $region72: #{tpu_custom_call.1} parent=59 // pred_fallthru
          _
      $region60: #{tpu_custom_call.1} parent=5 // pred_fallthru
        _
    $region6: #{tpu_custom_call.1} parent=1 // loop_footer
      %s25 = sadd.s32 1, %s21
    $region7: #{tpu_custom_call.1} parent=1 // loop_footer_branch
      %20 = sbr.rel target = $region3
    $region8: #{tpu_custom_call.1} parent=1 // loop_exit
      _
    %806 = vsyncpa [#allocation3], 1
    %s807 = scalar_lea.sflag [#allocation3], 1
    %808 = vsyncpa %s807, 1
    %809 = vsyncpa [#allocation5], 1
    %s810 = scalar_lea.sflag [#allocation5], 1
    %811 = vsyncpa %s810, 1

</llo_original>
